<compile_context>
chip_gen: v7x
topology: tpu7x:2x2x1
jax: 0.10.0
libtpu: 0.0.40
codegen_flags: <defaults>
</compile_context>

<pallas_src>
import functools

import jax
import jax.numpy as jnp
from jax.experimental import pallas as pl
from jax.experimental.pallas import tpu as pltpu

_NEG_SLOPE = 0.01  # F.leaky_relu default


def _round_up(x, m):
    return (x + m - 1) // m * m


def _actor_kernel(x_ref, w_ref, b_ref, eps_ref, out_ref, xpad_ref, *, act_dim):
    """One batch tile of the full forward pass.

    x_ref    : [TB, D_in]       unpadded observations (f32)
    w_ref    : [3, Dp, Dp]      packed zero-padded weights (w1, w2, [w_mu|w_var]), bf16
    b_ref    : [3, 1, Dp]       packed zero-padded biases, f32
    eps_ref  : [TB, A]          standard-normal noise (f32)
    out_ref  : [TB, A]          reparameterized sample mu + std * eps
    xpad_ref : [TB, Dp] scratch on-chip zero-extension of x to the 128-lane tile
    """
    d_in = x_ref.shape[1]

    # Zero-extend x to the padded feature tile entirely on-chip (never in HBM).
    # Padded lanes are exactly zero and the padded weight rows are zero, so the
    # math is identical to the unpadded network.
    xpad_ref[...] = jnp.zeros_like(xpad_ref)
    xpad_ref[:, :d_in] = x_ref[...]
    x = xpad_ref[...].astype(jnp.bfloat16)

    # shared_net: Linear -> tanh -> Linear (Identity output activation).
    # bf16 operands on the MXU, f32 accumulate, f32 element-wise math.
    h1 = jnp.tanh(
        jnp.dot(x, w_ref[0], preferred_element_type=jnp.float32) + b_ref[0]
    )
    h2 = jnp.dot(h1.astype(jnp.bfloat16), w_ref[1],
                 preferred_element_type=jnp.float32) + b_ref[1]

    # F.leaky_relu (negative_slope = 0.01) as a single VALU max.
    out = jnp.maximum(h2, _NEG_SLOPE * h2)

    # Fused mu/std head: lanes [0, A) hold mu, lanes [A, 2A) hold std.
    head = jnp.dot(out.astype(jnp.bfloat16), w_ref[2],
                   preferred_element_type=jnp.float32) + b_ref[2]
    mu = head[:, :act_dim]
    std = head[:, act_dim:2 * act_dim]

    # Normal(mu, std).rsample() == mu + std * eps (std is the raw linear output,
    # exactly as in the PyTorch module).
    out_ref[...] = (mu + std * eps_ref[...]).astype(out_ref.dtype)


def pack_params(params, d_pad=None):
    """Pack all Linear layers into one zero-padded weight / bias stack.

    Weights stored as [in, out] (already transposed vs torch's [out, in]) and
    cast to bf16 (MXU operands); biases stay f32 (added after the f32
    accumulate).  mu_net / var_net are fused along the output axis.  Call once
    at init time; the packed arrays are reused every forward.
    """
    w1, b1 = params["w1"], params["b1"]
    w2, b2 = params["w2"], params["b2"]
    w_head = jnp.concatenate([params["w_mu"], params["w_var"]], axis=1)
    b_head = jnp.concatenate([params["b_mu"], params["b_var"]], axis=1)

    dims = [w1.shape[0], w1.shape[1], w2.shape[1], w_head.shape[1]]
    if d_pad is None:
        d_pad = _round_up(max(dims), 128)
    assert max(dims) <= d_pad, "feature dims (incl. fused 2*act_dim head) must fit the tile"

    def pad_w(w):
        buf = jnp.zeros((d_pad, d_pad), jnp.bfloat16)
        return buf.at[: w.shape[0], : w.shape[1]].set(w.astype(jnp.bfloat16))

    def pad_b(b):
        buf = jnp.zeros((1, d_pad), jnp.float32)
        return buf.at[:, : b.shape[1]].set(b.astype(jnp.float32))

    w_all = jnp.stack([pad_w(w1), pad_w(w2), pad_w(w_head)], axis=0)   # [3,Dp,Dp] bf16
    b_all = jnp.stack([pad_b(b1), pad_b(b2), pad_b(b_head)], axis=0)   # [3,1,Dp]  f32
    return w_all, b_all


def _choose_tile(bp, block_b, min_grid):
    """Largest multiple-of-8 tile <= block_b that divides bp with >= min_grid steps."""
    max_tb = max(8, min(block_b, bp // min_grid))
    max_tb = (max_tb // 8) * 8
    for tb in range(max_tb, 7, -8):
        if bp % tb == 0:
            return tb
    return 8


def distilled_gaussian_actor(x, w_all, b_all, eps, *, block_b=1024):
    """x: [B, obs_dim + n_experts]; eps: [B, act_dim]; packed params from pack_params."""
    b, d_in = x.shape
    act_dim = eps.shape[1]
    d_pad = w_all.shape[-1]

    x = x.astype(jnp.float32)
    eps = eps.astype(jnp.float32)

    # Pad the batch only to a sublane multiple (<= 7 extra rows) - never the lanes.
    bp = _round_up(b, 8)
    if bp != b:
        x = jnp.pad(x, ((0, bp - b), (0, 0)))
        eps = jnp.pad(eps, ((0, bp - b), (0, 0)))

    # Batch tile: large tiles amortize the ~0.35us/step pipeline overhead; for
    # large batches cap the tile so the grid has >= 2 steps (v7x megacore),
    # while tiny batches keep the degenerate grid=(1,) (latency-bound, no split).
    min_grid = 2 if bp >= 1024 else 1
    tb = _choose_tile(bp, block_b, min_grid)
    grid = (bp // tb,)

    out = pl.pallas_call(
        functools.partial(_actor_kernel, act_dim=act_dim),
        out_shape=jax.ShapeDtypeStruct((bp, act_dim), jnp.float32),
        grid=grid,
        in_specs=[
            # x tile: last dim equals the full (unpadded) array dim -> legal.
            pl.BlockSpec((tb, d_in), lambda i: (i, 0)),
            # Constant weights / biases: whole-array, single-buffered VMEM residents.
            pl.BlockSpec(memory_space=pltpu.MemorySpace.VMEM),
            pl.BlockSpec(memory_space=pltpu.MemorySpace.VMEM),
            pl.BlockSpec((tb, act_dim), lambda i: (i, 0)),      # eps tile
        ],
        out_specs=pl.BlockSpec((tb, act_dim), lambda i: (i, 0)),
        scratch_shapes=[pltpu.VMEM((tb, d_pad), jnp.float32)],   # on-chip padded x
        compiler_params=pltpu.CompilerParams(
            dimension_semantics=("parallel",)
        ),
    )(x, w_all, b_all, eps)

    return out[:b]


def init_params(key, obs_dim, act_dim, hidden_sizes, n_experts):
    """Deterministic PyTorch-style (uniform +-1/sqrt(fan_in)) init.
    Weights stored as [in, out] (already transposed vs torch's [out, in])."""
    d_in = obs_dim + n_experts
    sizes = [d_in] + list(hidden_sizes)
    params = {}
    keys = jax.random.split(key, 8)

    def linear(kw, kb, fan_in, fan_out):
        bound = 1.0 / jnp.sqrt(fan_in)
        w = jax.random.uniform(kw, (fan_in, fan_out), jnp.float32, -bound, bound)
        b = jax.random.uniform(kb, (1, fan_out), jnp.float32, -bound, bound)
        return w, b

    params["w1"], params["b1"] = linear(keys[0], keys[1], sizes[0], sizes[1])
    params["w2"], params["b2"] = linear(keys[2], keys[3], sizes[1], sizes[2])
    params["w_mu"], params["b_mu"] = linear(keys[4], keys[5], sizes[2], act_dim)
    params["w_var"], params["b_var"] = linear(keys[6], keys[7], sizes[2], act_dim)
    return params


def reference(x, params, eps):
    """Pure-JAX f32 reference of the same forward pass (unfused, unpadded)."""
    h1 = jnp.tanh(x @ params["w1"] + params["b1"])
    h2 = h1 @ params["w2"] + params["b2"]
    out = jnp.where(h2 > 0, h2, _NEG_SLOPE * h2)
    mu = out @ params["w_mu"] + params["b_mu"]
    std = out @ params["w_var"] + params["b_var"]
    return mu + std * eps


if __name__ == "__main__":
    # Small, forward-consistent shapes
    batch = 8
    obs_dim = 8
    n_experts = 2          # obs_dim_aug = 10
    act_dim = 4
    hidden_sizes = (32, 32)

    key = jax.random.PRNGKey(0)
    k_param, k_x, k_eps = jax.random.split(key, 3)

    params = init_params(k_param, obs_dim, act_dim, hidden_sizes, n_experts)
    x = jax.random.normal(k_x, (batch, obs_dim + n_experts), jnp.float32)
    eps = jax.random.normal(k_eps, (batch, act_dim), jnp.float32)

    # Pack / pad parameters once (init-time cost, reused every forward).
    w_all, b_all = pack_params(params)

    # jit the wrapper so repeated actor steps reuse the compiled pallas_call and
    # keep the packed weights resident on device (amortizes fixed per-call cost).
    actor = jax.jit(distilled_gaussian_actor)

    y = actor(x, w_all, b_all, eps)
    y = jax.block_until_ready(y)

    y_ref = reference(x, params, eps)
    assert y.shape == (batch, act_dim)
    # bf16 matmul operands -> agree with the f32 reference to ~1e-2.
    assert jnp.allclose(y, y_ref, atol=3e-2, rtol=3e-2), "mismatch vs JAX reference"

    print("KERNEL_OK")
</pallas_src>

<mosaic_0001>
module attributes {stable_mosaic.version = 11 : i64} {
  func.func @_actor_kernel(%arg0: i32, %arg1: memref<8x10xf32, #tpu.memory_space<vmem>>, %arg2: memref<3x128x128xbf16, #tpu.memory_space<vmem>>, %arg3: memref<3x1x128xf32, #tpu.memory_space<vmem>>, %arg4: memref<8x4xf32, #tpu.memory_space<vmem>>, %arg5: memref<8x4xf32, #tpu.memory_space<vmem>>, %arg6: memref<8x128xf32, #tpu.memory_space<vmem>>) attributes {dimension_semantics = [#tpu.dimension_semantics<parallel>], iteration_bounds = array<i64: 1>, scalar_prefetch = 0 : i64, scratch_operands = 1 : i64, tpu.core_type = #tpu.core_type<tc>, window_params = [{transform_indices = @transform_0, window_bounds = array<i64: 8, 10>}, {pipeline_mode = #tpu.pipeline_mode<synchronous>, transform_indices = @transform_1, window_bounds = array<i64: 3, 128, 128>}, {pipeline_mode = #tpu.pipeline_mode<synchronous>, transform_indices = @transform_2, window_bounds = array<i64: 3, 1, 128>}, {transform_indices = @transform_3, window_bounds = array<i64: 8, 4>}, {transform_indices = @transform_4, window_bounds = array<i64: 8, 4>}]} {
    %cst = arith.constant 0.000000e+00 : f32
    %0 = vector.broadcast %cst : f32 to vector<8x128xf32>
    %c0 = arith.constant 0 : index
    %c0_0 = arith.constant 0 : index
    %1 = vector.load %arg6[%c0, %c0_0] : memref<8x128xf32, #tpu.memory_space<vmem>>, vector<8x128xf32>
    tpu.vector_store %arg6[%c0, %c0_0], %0 {strides = array<i32>} : memref<8x128xf32, #tpu.memory_space<vmem>>, vector<8x128xf32>,
    %c0_1 = arith.constant 0 : index
    %c0_2 = arith.constant 0 : index
    %2 = vector.load %arg1[%c0_1, %c0_2] : memref<8x10xf32, #tpu.memory_space<vmem>>, vector<8x10xf32>
    %c0_3 = arith.constant 0 : index
    %c0_4 = arith.constant 0 : index
    %3 = vector.load %arg6[%c0_3, %c0_4] : memref<8x128xf32, #tpu.memory_space<vmem>>, vector<8x10xf32>
    tpu.vector_store %arg6[%c0_3, %c0_4], %2 {strides = array<i32>} : memref<8x128xf32, #tpu.memory_space<vmem>>, vector<8x10xf32>,
    %c0_5 = arith.constant 0 : index
    %c0_6 = arith.constant 0 : index
    %4 = vector.load %arg6[%c0_5, %c0_6] : memref<8x128xf32, #tpu.memory_space<vmem>>, vector<8x128xf32>
    %5 = arith.truncf %4 : vector<8x128xf32> to vector<8x128xbf16>
    %c0_7 = arith.constant 0 : index
    %c0_8 = arith.constant 0 : index
    %c0_9 = arith.constant 0 : index
    %6 = vector.load %arg2[%c0_7, %c0_8, %c0_9] : memref<3x128x128xbf16, #tpu.memory_space<vmem>>, vector<1x128x128xbf16>
    %7 = vector.shape_cast %6 : vector<1x128x128xbf16> to vector<128x128xbf16>
    %cst_10 = arith.constant dense<0.000000e+00> : vector<8x128xf32>
    %8 = tpu.matmul %5, %7, %cst_10 {dimension_numbers = #tpu.dot_dimension_numbers<[1], [0], [0], [1], [0, 0, 1, 1], [], []>} : vector<8x128xbf16>, vector<128x128xbf16>, vector<8x128xf32> -> vector<8x128xf32>
    %c0_11 = arith.constant 0 : index
    %c0_12 = arith.constant 0 : index
    %c0_13 = arith.constant 0 : index
    %9 = vector.load %arg3[%c0_11, %c0_12, %c0_13] : memref<3x1x128xf32, #tpu.memory_space<vmem>>, vector<1x1x128xf32>
    %10 = vector.shape_cast %9 : vector<1x1x128xf32> to vector<1x128xf32>
    %11 = vector.broadcast %10 : vector<1x128xf32> to vector<8x128xf32>
    %12 = arith.addf %8, %11 : vector<8x128xf32>
    %13 = math.tanh %12 : vector<8x128xf32>
    %14 = arith.truncf %13 : vector<8x128xf32> to vector<8x128xbf16>
    %c1 = arith.constant 1 : index
    %c0_14 = arith.constant 0 : index
    %c0_15 = arith.constant 0 : index
    %15 = vector.load %arg2[%c1, %c0_14, %c0_15] : memref<3x128x128xbf16, #tpu.memory_space<vmem>>, vector<1x128x128xbf16>
    %16 = vector.shape_cast %15 : vector<1x128x128xbf16> to vector<128x128xbf16>
    %cst_16 = arith.constant dense<0.000000e+00> : vector<8x128xf32>
    %17 = tpu.matmul %14, %16, %cst_16 {dimension_numbers = #tpu.dot_dimension_numbers<[1], [0], [0], [1], [0, 0, 1, 1], [], []>} : vector<8x128xbf16>, vector<128x128xbf16>, vector<8x128xf32> -> vector<8x128xf32>
    %c1_17 = arith.constant 1 : index
    %c0_18 = arith.constant 0 : index
    %c0_19 = arith.constant 0 : index
    %18 = vector.load %arg3[%c1_17, %c0_18, %c0_19] : memref<3x1x128xf32, #tpu.memory_space<vmem>>, vector<1x1x128xf32>
    %19 = vector.shape_cast %18 : vector<1x1x128xf32> to vector<1x128xf32>
    %20 = vector.broadcast %19 : vector<1x128xf32> to vector<8x128xf32>
    %21 = arith.addf %17, %20 : vector<8x128xf32>
    %cst_20 = arith.constant 0.00999999977 : f32
    %22 = vector.broadcast %cst_20 : f32 to vector<8x128xf32>
    %23 = arith.mulf %22, %21 : vector<8x128xf32>
    %24 = arith.maximumf %21, %23 : vector<8x128xf32>
    %25 = arith.truncf %24 : vector<8x128xf32> to vector<8x128xbf16>
    %c2 = arith.constant 2 : index
    %c0_21 = arith.constant 0 : index
    %c0_22 = arith.constant 0 : index
    %26 = vector.load %arg2[%c2, %c0_21, %c0_22] : memref<3x128x128xbf16, #tpu.memory_space<vmem>>, vector<1x128x128xbf16>
    %27 = vector.shape_cast %26 : vector<1x128x128xbf16> to vector<128x128xbf16>
    %cst_23 = arith.constant dense<0.000000e+00> : vector<8x128xf32>
    %28 = tpu.matmul %25, %27, %cst_23 {dimension_numbers = #tpu.dot_dimension_numbers<[1], [0], [0], [1], [0, 0, 1, 1], [], []>} : vector<8x128xbf16>, vector<128x128xbf16>, vector<8x128xf32> -> vector<8x128xf32>
    %c2_24 = arith.constant 2 : index
    %c0_25 = arith.constant 0 : index
    %c0_26 = arith.constant 0 : index
    %29 = vector.load %arg3[%c2_24, %c0_25, %c0_26] : memref<3x1x128xf32, #tpu.memory_space<vmem>>, vector<1x1x128xf32>
    %30 = vector.shape_cast %29 : vector<1x1x128xf32> to vector<1x128xf32>
    %31 = vector.broadcast %30 : vector<1x128xf32> to vector<8x128xf32>
    %32 = arith.addf %28, %31 : vector<8x128xf32>
    %33 = vector.extract_strided_slice %32 {offsets = [0, 0], sizes = [8, 4], strides = [1, 1]} : vector<8x128xf32> to vector<8x4xf32>
    %34 = vector.extract_strided_slice %32 {offsets = [0, 4], sizes = [8, 4], strides = [1, 1]} : vector<8x128xf32> to vector<8x4xf32>
    %c0_27 = arith.constant 0 : index
    %c0_28 = arith.constant 0 : index
    %35 = vector.load %arg4[%c0_27, %c0_28] : memref<8x4xf32, #tpu.memory_space<vmem>>, vector<8x4xf32>
    %36 = arith.mulf %34, %35 : vector<8x4xf32>
    %37 = arith.addf %33, %36 : vector<8x4xf32>
    %c0_29 = arith.constant 0 : index
    %c0_30 = arith.constant 0 : index
    %38 = vector.load %arg5[%c0_29, %c0_30] : memref<8x4xf32, #tpu.memory_space<vmem>>, vector<8x4xf32>
    tpu.vector_store %arg5[%c0_29, %c0_30], %37 {strides = array<i32>} : memref<8x4xf32, #tpu.memory_space<vmem>>, vector<8x4xf32>,
    return
  }
  func.func @transform_0(%arg0: i32) -> (i32, i32) {
    %c0_i32 = arith.constant 0 : i32
    %c0_i32_0 = arith.constant 0 : i32
    return %arg0, %c0_i32 : i32, i32
  }
  func.func @transform_1(%arg0: i32) -> (i32, i32, i32) {
    %c0_i32 = arith.constant 0 : i32
    %c0_i32_0 = arith.constant 0 : i32
    %c0_i32_1 = arith.constant 0 : i32
    %c0_i32_2 = arith.constant 0 : i32
    return %c0_i32, %c0_i32_0, %c0_i32_1 : i32, i32, i32
  }
  func.func @transform_2(%arg0: i32) -> (i32, i32, i32) {
    %c0_i32 = arith.constant 0 : i32
    %c0_i32_0 = arith.constant 0 : i32
    %c0_i32_1 = arith.constant 0 : i32
    %c0_i32_2 = arith.constant 0 : i32
    return %c0_i32, %c0_i32_0, %c0_i32_1 : i32, i32, i32
  }
  func.func @transform_3(%arg0: i32) -> (i32, i32) {
    %c0_i32 = arith.constant 0 : i32
    %c0_i32_0 = arith.constant 0 : i32
    return %arg0, %c0_i32 : i32, i32
  }
  func.func @transform_4(%arg0: i32) -> (i32, i32) {
    %c0_i32 = arith.constant 0 : i32
    %c0_i32_0 = arith.constant 0 : i32
    return %arg0, %c0_i32 : i32, i32
  }
}

</mosaic_0001>

<llo_original>
// kernel: distilled_gaussian_actor.1
$region0: #{distilled_gaussian_actor.1}
  #allocation0 [shape = 'u32[]', space=smem, size = 0x4, offset = 0x4, fixed_abs, tag = 'smem constant byte address 0x4 - core index']
  #allocation1 [shape = 'u32[144,128]{1,0:T(1,128)}', space=vmem, size = 0x12000, scoped, tag = 'internal scratch']
  #allocation2 [shape = 'f32[8,128]{1,0:T(8,128)}', space=vmem, size = 0x1000, scoped, tag = 'scratch operand']
  %s0 = inlined_call_operand.vmem [shape: f32[8,10], index: 0, kind: input, shape index: {}]
  %s1 = inlined_call_operand.hbm [shape: bf16[3,128,128], index: 1, kind: input, shape index: {}]
  %s2 = inlined_call_operand.vmem [shape: f32[3,1,128], index: 2, kind: input, shape index: {}]
  %s3 = inlined_call_operand.vmem [shape: f32[8,4], index: 3, kind: input, shape index: {}]
  %s4 = inlined_call_operand.vmem [shape: f32[8,4], index: 4, kind: output, shape index: {}]
  %s5 = sld [smem:[#allocation0]]
  $region30: #{distilled_gaussian_actor.1} parent=0
    _
  %s7 = ssub.s32 1, %s5
  %s8 = scalar_select 0, %s7, %s5
  $region1: #{distilled_gaussian_actor.1} parent=0
    #allocation3 [shape = 'u8[98304]{0}', space=vmem, size = 0x18000, scoped, tag = 'input window, operand 1, single buffered']
    #allocation4 [shape = 's32[1]{0}', space=sflag, size = 0x4, scoped, tag = 'scoped memory for distilled_gaussian_actor.1']
    %9 = vsyncpa [#allocation4], 0
    // Predicated region
    $region2: #{distilled_gaussian_actor.1} parent=1 // pred_check
      _
    $region3: #{distilled_gaussian_actor.1} parent=1 // pred_check_branch
      %11 = sbr.rel (0) target = $region5
    $region4: #{distilled_gaussian_actor.1} parent=1 // pred_region
      _
    $region5: #{distilled_gaussian_actor.1} parent=1 // pred_fallthru
      _
    // Predicated region
    $region6: #{distilled_gaussian_actor.1} parent=1 // pred_check
      _
    $region7: #{distilled_gaussian_actor.1} parent=1 // pred_check_branch
      %13 = sbr.rel (0) target = $region9
    $region8: #{distilled_gaussian_actor.1} parent=1 // pred_region
      %s15 = ssub.s32 3072, 3072
      %16 = vsyncadd [#allocation4], %s15
      %s17 = sshll.u32 [#allocation3], 4
      %s18 = int_to_ptr.vmem [resolvable:$true] %s17
      %23 = dma.hbm_to_vmem [thread:$0]  %s1, 3072, %s18, [#allocation4], 64, 64, 4
    $region9: #{distilled_gaussian_actor.1} parent=1 // pred_fallthru
      _
    // Predicated region
    $region10: #{distilled_gaussian_actor.1} parent=1 // pred_check
      _
    $region11: #{distilled_gaussian_actor.1} parent=1 // pred_check_branch
      %25 = sbr.rel (0) target = $region13
    $region12: #{distilled_gaussian_actor.1} parent=1 // pred_region
      _
    $region13: #{distilled_gaussian_actor.1} parent=1 // pred_fallthru
      _
    // Predicated region
    $region14: #{distilled_gaussian_actor.1} parent=1 // pred_check
      _
    $region15: #{distilled_gaussian_actor.1} parent=1 // pred_check_branch
      %27 = sbr.rel (0) target = $region17
    $region16: #{distilled_gaussian_actor.1} parent=1 // pred_region
      _
    $region17: #{distilled_gaussian_actor.1} parent=1 // pred_fallthru
      _
    // Predicated region
    $region18: #{distilled_gaussian_actor.1} parent=1 // pred_check
      _
    $region19: #{distilled_gaussian_actor.1} parent=1 // pred_check_branch
      %29 = sbr.rel (0) target = $region21
    $region20: #{distilled_gaussian_actor.1} parent=1 // pred_region
      %30 = dma.done [#allocation4], 3072
    $region21: #{distilled_gaussian_actor.1} parent=1 // pred_fallthru
      _
    %32 = vst [vmem:[#allocation2] sm:$0xff] 0.0
    %v33 = vld [vmem:[%s0] sm:$0xff]
    %vm34 = vcmask 80896
    %35 = vst.msk [vmem:[#allocation2] sm:$0xff] %vm34, %v33
    %v36 = vld [vmem:[#allocation2] sm:$0xff]
    %v37 = vpack.c.bf16 %v36, %v36
    %v38 = vld [vmem:[#allocation3] sm:$0xf]
    %v39 = vld [vmem:[#allocation3 + $0x4] sm:$0xf]
    %v40 = vld [vmem:[#allocation3 + $0x8] sm:$0xf]
    %v41 = vld [vmem:[#allocation3 + $0xc] sm:$0xf]
    %v42 = vld [vmem:[#allocation3 + $0x10] sm:$0xf]
    %v43 = vld [vmem:[#allocation3 + $0x14] sm:$0xf]
    %v44 = vld [vmem:[#allocation3 + $0x18] sm:$0xf]
    %v45 = vld [vmem:[#allocation3 + $0x1c] sm:$0xf]
    %v46 = vld [vmem:[#allocation3 + $0x20] sm:$0xf]
    %v47 = vld [vmem:[#allocation3 + $0x24] sm:$0xf]
    %v48 = vld [vmem:[#allocation3 + $0x28] sm:$0xf]
    %v49 = vld [vmem:[#allocation3 + $0x2c] sm:$0xf]
    %v50 = vld [vmem:[#allocation3 + $0x30] sm:$0xf]
    %v51 = vld [vmem:[#allocation3 + $0x34] sm:$0xf]
    %v52 = vld [vmem:[#allocation3 + $0x38] sm:$0xf]
    %v53 = vld [vmem:[#allocation3 + $0x3c] sm:$0xf]
    %v54 = vld [vmem:[%s2] sm:$0x1]
    %v56 = vlaneseq
    %v57 = vshrl.u32 %v56, 7
    %v58 = vsub.s32 0, %v57
    %v59 = vrot.slane %v54, %v58
    %v77 = vunpack.c.l.b16 %v38
    %v78 = vunpack.c.l.b16 %v39
    %v79 = vunpack.c.l.b16 %v40
    %v80 = vunpack.c.l.b16 %v41
    %v81 = vunpack.c.l.b16 %v42
    %v82 = vunpack.c.l.b16 %v43
    %v83 = vunpack.c.l.b16 %v44
    %v84 = vunpack.c.l.b16 %v45
    %v85 = vunpack.c.l.b16 %v46
    %v86 = vunpack.c.l.b16 %v47
    %v87 = vunpack.c.l.b16 %v48
    %v88 = vunpack.c.l.b16 %v49
    %v89 = vunpack.c.l.b16 %v50
    %v90 = vunpack.c.l.b16 %v51
    %v91 = vunpack.c.l.b16 %v52
    %v92 = vunpack.c.l.b16 %v53
    %v93 = vpack.c.b16 %v78, %v77
    %v94 = vpack.c.b16 %v80, %v79
    %v95 = vpack.c.b16 %v82, %v81
    %v96 = vpack.c.b16 %v84, %v83
    %v97 = vpack.c.b16 %v86, %v85
    %v98 = vpack.c.b16 %v88, %v87
    %v99 = vpack.c.b16 %v90, %v89
    %v100 = vpack.c.b16 %v92, %v91
    %109 = vmatprep.subr.bf16.mxu0 0
    %110 = vmatpush1.bf16.msra.mxu0 %v93
    %111 = vmatprep.subr.bf16.mxu0 0
    %112 = vmatpush1.bf16.msra.mxu0 %v94
    %113 = vmatprep.subr.bf16.mxu0 0
    %114 = vmatpush1.bf16.msra.mxu0 %v95
    %115 = vmatprep.subr.bf16.mxu0 0
    %116 = vmatpush1.bf16.msra.mxu0 %v96
    %117 = vmatprep.subr.bf16.mxu0 0
    %118 = vmatpush1.bf16.msra.mxu0 %v97
    %119 = vmatprep.subr.bf16.mxu0 0
    %120 = vmatpush1.bf16.msra.mxu0 %v98
    %121 = vmatprep.subr.bf16.mxu0 0
    %122 = vmatpush1.bf16.msra.mxu0 %v99
    %123 = vmatprep.subr.bf16.mxu0 0
    %124 = vmatpush1.bf16.msra.mxu0 %v100
    %125 = vmatprep.subr.bf16.mxu0 0
    %126 = vmatpush1.bf16.msra.mxu0 0
    %127 = vmatprep.subr.bf16.mxu0 0
    %128 = vmatpush1.bf16.msra.mxu0 0
    %129 = vmatprep.subr.bf16.mxu0 0
    %130 = vmatpush1.bf16.msra.mxu0 0
    %131 = vmatprep.subr.bf16.mxu0 0
    %132 = vmatpush1.bf16.msra.mxu0 0
    %133 = vmatprep.subr.bf16.mxu0 0
    %134 = vmatpush1.bf16.msra.mxu0 0
    %135 = vmatprep.subr.bf16.mxu0 0
    %136 = vmatpush1.bf16.msra.mxu0 0
    %137 = vmatprep.subr.bf16.mxu0 0
    %138 = vmatpush1.bf16.msra.mxu0 0
    %139 = vmatprep.subr.bf16.mxu0 0
    %140 = vmatpush1.bf16.msra.mxu0 0
    %141 = vmatprep.mubr.bf16.mxu0 0
    %142 = vmatmul.mubr.bf16.gmra.mrb[0].mxu0 %v37
    %v143 = vpop.f32.mrb[0].mxu0
    %v144 = vadd.f32 %v59, %v143
    %v145 = vpop.f32.mrb[0].mxu0
    %v146 = vpop.f32.mrb[0].mxu0
    %v147 = vpop.f32.mrb[0].mxu0
    %148 = vdwg.mxu0
    %v149 = vtanh.pop %v144
    %v150 = vpack.c.bf16 %v149, %v149
    %s151 = scalar_lea.vmem [#allocation3], 64
    %v152 = vld [vmem:[%s151] sm:$0xf]
    %v153 = vld [vmem:[%s151 + $0x4] sm:$0xf]
    %v154 = vld [vmem:[%s151 + $0x8] sm:$0xf]
    %v155 = vld [vmem:[%s151 + $0xc] sm:$0xf]
    %v156 = vld [vmem:[%s151 + $0x10] sm:$0xf]
    %v157 = vld [vmem:[%s151 + $0x14] sm:$0xf]
    %v158 = vld [vmem:[%s151 + $0x18] sm:$0xf]
    %v159 = vld [vmem:[%s151 + $0x1c] sm:$0xf]
    %v160 = vld [vmem:[%s151 + $0x20] sm:$0xf]
    %v161 = vld [vmem:[%s151 + $0x24] sm:$0xf]
    %v162 = vld [vmem:[%s151 + $0x28] sm:$0xf]
    %v163 = vld [vmem:[%s151 + $0x2c] sm:$0xf]
    %v164 = vld [vmem:[%s151 + $0x30] sm:$0xf]
    %v165 = vld [vmem:[%s151 + $0x34] sm:$0xf]
    %v166 = vld [vmem:[%s151 + $0x38] sm:$0xf]
    %v167 = vld [vmem:[%s151 + $0x3c] sm:$0xf]
    %s168 = scalar_lea.vmem %s2, 1
    %v169 = vld [vmem:[%s168] sm:$0x1]
    %v171 = vlaneseq
    %v172 = vshrl.u32 %v171, 7
    %v173 = vsub.s32 0, %v172
    %v174 = vrot.slane %v169, %v173
    %v192 = vunpack.c.l.b16 %v152
    %v193 = vunpack.c.l.b16 %v153
    %v194 = vunpack.c.l.b16 %v154
    %v195 = vunpack.c.l.b16 %v155
    %v196 = vunpack.c.l.b16 %v156
    %v197 = vunpack.c.l.b16 %v157
    %v198 = vunpack.c.l.b16 %v158
    %v199 = vunpack.c.l.b16 %v159
    %v200 = vunpack.c.l.b16 %v160
    %v201 = vunpack.c.l.b16 %v161
    %v202 = vunpack.c.l.b16 %v162
    %v203 = vunpack.c.l.b16 %v163
    %v204 = vunpack.c.l.b16 %v164
    %v205 = vunpack.c.l.b16 %v165
    %v206 = vunpack.c.l.b16 %v166
    %v207 = vunpack.c.l.b16 %v167
    %v208 = vpack.c.b16 %v193, %v192
    %v209 = vpack.c.b16 %v195, %v194
    %v210 = vpack.c.b16 %v197, %v196
    %v211 = vpack.c.b16 %v199, %v198
    %v212 = vpack.c.b16 %v201, %v200
    %v213 = vpack.c.b16 %v203, %v202
    %v214 = vpack.c.b16 %v205, %v204
    %v215 = vpack.c.b16 %v207, %v206
    %224 = vmatprep.subr.bf16.mxu0 0
    %225 = vmatpush1.bf16.msra.mxu0 %v208
    %226 = vmatprep.subr.bf16.mxu0 0
    %227 = vmatpush1.bf16.msra.mxu0 %v209
    %228 = vmatprep.subr.bf16.mxu0 0
    %229 = vmatpush1.bf16.msra.mxu0 %v210
    %230 = vmatprep.subr.bf16.mxu0 0
    %231 = vmatpush1.bf16.msra.mxu0 %v211
    %232 = vmatprep.subr.bf16.mxu0 0
    %233 = vmatpush1.bf16.msra.mxu0 %v212
    %234 = vmatprep.subr.bf16.mxu0 0
    %235 = vmatpush1.bf16.msra.mxu0 %v213
    %236 = vmatprep.subr.bf16.mxu0 0
    %237 = vmatpush1.bf16.msra.mxu0 %v214
    %238 = vmatprep.subr.bf16.mxu0 0
    %239 = vmatpush1.bf16.msra.mxu0 %v215
    %240 = vmatprep.subr.bf16.mxu0 0
    %241 = vmatpush1.bf16.msra.mxu0 0
    %242 = vmatprep.subr.bf16.mxu0 0
    %243 = vmatpush1.bf16.msra.mxu0 0
    %244 = vmatprep.subr.bf16.mxu0 0
    %245 = vmatpush1.bf16.msra.mxu0 0
    %246 = vmatprep.subr.bf16.mxu0 0
    %247 = vmatpush1.bf16.msra.mxu0 0
    %248 = vmatprep.subr.bf16.mxu0 0
    %249 = vmatpush1.bf16.msra.mxu0 0
    %250 = vmatprep.subr.bf16.mxu0 0
    %251 = vmatpush1.bf16.msra.mxu0 0
    %252 = vmatprep.subr.bf16.mxu0 0
    %253 = vmatpush1.bf16.msra.mxu0 0
    %254 = vmatprep.subr.bf16.mxu0 0
    %255 = vmatpush1.bf16.msra.mxu0 0
    %256 = vmatprep.mubr.bf16.mxu0 0
    %257 = vmatmul.mubr.bf16.gmra.mrb[0].mxu0 %v150
    %v258 = vpop.f32.mrb[0].mxu0
    %v259 = vadd.f32 %v174, %v258
    %v260 = vpop.f32.mrb[0].mxu0
    %v261 = vpop.f32.mrb[0].mxu0
    %v262 = vpop.f32.mrb[0].mxu0
    %263 = vdwg.mxu0
    %v264 = vmul.f32 %v259, 0.01
    %v265 = vmax.f32 %v259, %v264
    %v266 = vpack.c.bf16 %v265, %v265
    %s267 = scalar_lea.vmem [#allocation3], 128
    %v268 = vld [vmem:[%s267] sm:$0xf]
    %v269 = vld [vmem:[%s267 + $0x4] sm:$0xf]
    %v270 = vld [vmem:[%s267 + $0x8] sm:$0xf]
    %v271 = vld [vmem:[%s267 + $0xc] sm:$0xf]
    %v272 = vld [vmem:[%s267 + $0x10] sm:$0xf]
    %v273 = vld [vmem:[%s267 + $0x14] sm:$0xf]
    %v274 = vld [vmem:[%s267 + $0x18] sm:$0xf]
    %v275 = vld [vmem:[%s267 + $0x1c] sm:$0xf]
    %v276 = vld [vmem:[%s267 + $0x20] sm:$0xf]
    %v277 = vld [vmem:[%s267 + $0x24] sm:$0xf]
    %v278 = vld [vmem:[%s267 + $0x28] sm:$0xf]
    %v279 = vld [vmem:[%s267 + $0x2c] sm:$0xf]
    %v280 = vld [vmem:[%s267 + $0x30] sm:$0xf]
    %v281 = vld [vmem:[%s267 + $0x34] sm:$0xf]
    %v282 = vld [vmem:[%s267 + $0x38] sm:$0xf]
    %v283 = vld [vmem:[%s267 + $0x3c] sm:$0xf]
    %s284 = scalar_lea.vmem %s2, 2
    %v285 = vld [vmem:[%s284] sm:$0x1]
    %v287 = vlaneseq
    %v288 = vshrl.u32 %v287, 7
    %v289 = vsub.s32 0, %v288
    %v290 = vrot.slane %v285, %v289
    %v308 = vunpack.c.l.b16 %v268
    %v309 = vunpack.c.l.b16 %v269
    %v310 = vunpack.c.l.b16 %v270
    %v311 = vunpack.c.l.b16 %v271
    %v312 = vunpack.c.l.b16 %v272
    %v313 = vunpack.c.l.b16 %v273
    %v314 = vunpack.c.l.b16 %v274
    %v315 = vunpack.c.l.b16 %v275
    %v316 = vunpack.c.l.b16 %v276
    %v317 = vunpack.c.l.b16 %v277
    %v318 = vunpack.c.l.b16 %v278
    %v319 = vunpack.c.l.b16 %v279
    %v320 = vunpack.c.l.b16 %v280
    %v321 = vunpack.c.l.b16 %v281
    %v322 = vunpack.c.l.b16 %v282
    %v323 = vunpack.c.l.b16 %v283
    %v324 = vpack.c.b16 %v309, %v308
    %v325 = vpack.c.b16 %v311, %v310
    %v326 = vpack.c.b16 %v313, %v312
    %v327 = vpack.c.b16 %v315, %v314
    %v328 = vpack.c.b16 %v317, %v316
    %v329 = vpack.c.b16 %v319, %v318
    %v330 = vpack.c.b16 %v321, %v320
    %v331 = vpack.c.b16 %v323, %v322
    %340 = vmatprep.subr.bf16.mxu0 0
    %341 = vmatpush1.bf16.msra.mxu0 %v324
    %342 = vmatprep.subr.bf16.mxu0 0
    %343 = vmatpush1.bf16.msra.mxu0 %v325
    %344 = vmatprep.subr.bf16.mxu0 0
    %345 = vmatpush1.bf16.msra.mxu0 %v326
    %346 = vmatprep.subr.bf16.mxu0 0
    %347 = vmatpush1.bf16.msra.mxu0 %v327
    %348 = vmatprep.subr.bf16.mxu0 0
    %349 = vmatpush1.bf16.msra.mxu0 %v328
    %350 = vmatprep.subr.bf16.mxu0 0
    %351 = vmatpush1.bf16.msra.mxu0 %v329
    %352 = vmatprep.subr.bf16.mxu0 0
    %353 = vmatpush1.bf16.msra.mxu0 %v330
    %354 = vmatprep.subr.bf16.mxu0 0
    %355 = vmatpush1.bf16.msra.mxu0 %v331
    %356 = vmatprep.subr.bf16.mxu0 0
    %357 = vmatpush1.bf16.msra.mxu0 0
    %358 = vmatprep.subr.bf16.mxu0 0
    %359 = vmatpush1.bf16.msra.mxu0 0
    %360 = vmatprep.subr.bf16.mxu0 0
    %361 = vmatpush1.bf16.msra.mxu0 0
    %362 = vmatprep.subr.bf16.mxu0 0
    %363 = vmatpush1.bf16.msra.mxu0 0
    %364 = vmatprep.subr.bf16.mxu0 0
    %365 = vmatpush1.bf16.msra.mxu0 0
    %366 = vmatprep.subr.bf16.mxu0 0
    %367 = vmatpush1.bf16.msra.mxu0 0
    %368 = vmatprep.subr.bf16.mxu0 0
    %369 = vmatpush1.bf16.msra.mxu0 0
    %370 = vmatprep.subr.bf16.mxu0 0
    %371 = vmatpush1.bf16.msra.mxu0 0
    %372 = vmatprep.mubr.bf16.mxu0 0
    %373 = vmatmul.mubr.bf16.gmra.mrb[0].mxu0 %v266
    %v374 = vpop.f32.mrb[0].mxu0
    %v375 = vadd.f32 %v290, %v374
    %v376 = vpop.f32.mrb[0].mxu0
    %v377 = vpop.f32.mrb[0].mxu0
    %v378 = vpop.f32.mrb[0].mxu0
    %379 = vdwg.mxu0
    %v380 = vld [vmem:[%s3] sm:$0xff]
    %382 = vrot.lane.b32.xlu0 %v380, 4
    %v383 = vpop.permute.xlu0 %382
    %v385 = vmul.f32 %v375, %v383
    %387 = vrot.lane.b32.xlu0 %v385, 124
    %v388 = vpop.permute.xlu0 %387
    %v390 = vadd.f32 %v375, %v388
    %vm391 = vcmask 31744
    %392 = vst.msk [vmem:[%s4] sm:$0xff] %vm391, %v390
    // Predicated region
    $region22: #{distilled_gaussian_actor.1} parent=1 // pred_check
      _
    $region23: #{distilled_gaussian_actor.1} parent=1 // pred_check_branch
      %394 = sbr.rel (0) target = $region25
    $region24: #{distilled_gaussian_actor.1} parent=1 // pred_region
      _
    $region25: #{distilled_gaussian_actor.1} parent=1 // pred_fallthru
      _
    // Predicated region
    $region26: #{distilled_gaussian_actor.1} parent=1 // pred_check
      _
    $region27: #{distilled_gaussian_actor.1} parent=1 // pred_check_branch
      %396 = sbr.rel (0) target = $region29
    $region28: #{distilled_gaussian_actor.1} parent=1 // pred_region
      _
    $region29: #{distilled_gaussian_actor.1} parent=1 // pred_fallthru
      _
    %397 = vsyncpa [#allocation4], 1

</llo_original>
